<compile_context>
chip_gen: v5e
topology: v5e:2x2
jax: 0.10.0
libtpu: 0.0.40
codegen_flags: <defaults>
</compile_context>

<pallas_src>
import functools

import jax
import jax.numpy as jnp
from jax import lax
from jax.experimental import pallas as pl
from jax.experimental.pallas import tpu as pltpu

_BN_EPS = 1e-5
_LEAKY_SLOPE = 0.1
_VMEM_LIMIT = 32 * 1024 * 1024  # safe on v5e/v6e (128 MiB) and v7x (64 MiB)


def _round_up(x, m):
    return (x + m - 1) // m * m


# ---------------- pass 1: tiled conv-as-matmul + per-tile BN partials --------


def _conv_stats_kernel(x_ref, w_ref, y_ref, stats_ref):
    # x_ref:     [TM, Kp]  bf16 (im2col rows for this M-tile)
    # w_ref:     [Kp, Cp]  bf16 (resident)
    # y_ref:     [TM, Cp]  f32  (pre-BN conv output tile)
    # stats_ref: [8,  Cp]  f32  (row 0 = sum_y, row 1 = sum_y^2, rows 2..7 = 0)
    y = jnp.dot(x_ref[...], w_ref[...], preferred_element_type=jnp.float32)
    y_ref[...] = y

    s = jnp.sum(y, axis=0, keepdims=True)        # [1, Cp]
    ss = jnp.sum(y * y, axis=0, keepdims=True)   # [1, Cp]
    pad = jnp.zeros((6, y.shape[1]), jnp.float32)
    stats_ref[...] = jnp.concatenate([s, ss, pad], axis=0)


# ---------------- pass 2: tiled batchnorm-apply + leaky relu -----------------


def _bn_act_kernel(y_ref, scale_ref, shift_ref, o_ref):
    # y_ref: [TM, Cp] f32; scale/shift: [1, Cp] f32 (resident)
    z = y_ref[...] * scale_ref[...] + shift_ref[...]
    o_ref[...] = jnp.where(z > 0, z, _LEAKY_SLOPE * z)


# ---------------- wrapper ----------------------------------------------------


@functools.partial(jax.jit, static_argnames=("stride", "padding", "tile_m"))
def cnn_block_forward(x_nchw, weight_oihw, gamma, beta, *,
                      stride=1, padding=1, tile_m=512):
    """x_nchw: [N, Cin, H, W]; weight_oihw: [Cout, Cin, KH, KW] (PyTorch layout)."""
    N, Cin, H, W = x_nchw.shape
    Cout, _, KH, KW = weight_oihw.shape

    # NCHW -> NHWC + spatial zero padding.  I/O stays NCHW to match the module.
    # TODO(synk): for large activations keep the whole pipeline NHWC end-to-end
    # to avoid these two full-tensor transpose passes over HBM.
    x_nhwc = jnp.transpose(x_nchw, (0, 2, 3, 1))
    xp = jnp.pad(x_nhwc, ((0, 0), (padding, padding), (padding, padding), (0, 0)))

    Hout = (H + 2 * padding - KH) // stride + 1
    Wout = (W + 2 * padding - KW) // stride + 1
    M = N * Hout * Wout
    Kdim = KH * KW * Cin

    # im2col (patch order: kh, kw, cin with cin fastest).
    # TODO(synk): for large shapes avoid materializing the KH*KW-inflated im2col
    # matrix in HBM (do the conv as KH*KW shifted matmuls over a haloed NHWC
    # tile brought into VMEM once); acceptable here only for tiny shapes.
    patches = []
    for kh in range(KH):
        for kw in range(KW):
            patches.append(
                lax.slice(
                    xp,
                    (0, kh, kw, 0),
                    (N, kh + (Hout - 1) * stride + 1,
                     kw + (Wout - 1) * stride + 1, Cin),
                    (1, stride, stride, 1)))
    x_mat = jnp.concatenate(patches, axis=-1).reshape(M, Kdim)

    # [Cout, Cin, KH, KW] -> [KH, KW, Cin, Cout] -> [Kdim, Cout] (matches patches).
    w_mat = jnp.transpose(weight_oihw, (2, 3, 1, 0)).reshape(Kdim, Cout)

    # Pad to vreg/MXU-friendly shapes: lane dims to 128, M rows to the tile.
    Kp = _round_up(Kdim, 128)
    Cp = _round_up(Cout, 128)
    TM = min(tile_m, _round_up(M, 8))
    Mp = _round_up(M, TM)
    num_tiles = Mp // TM

    x_mat = jnp.pad(x_mat, ((0, Mp - M), (0, Kp - Kdim))).astype(jnp.bfloat16)
    w_mat = jnp.pad(w_mat, ((0, Kp - Kdim), (0, Cp - Cout))).astype(jnp.bfloat16)

    # ---- pass 1: conv matmul + per-tile BN partial sums ----------------------
    p1_cost = pl.CostEstimate(
        flops=2 * Mp * Kp * Cp,
        transcendentals=0,
        bytes_accessed=x_mat.size * 2 + w_mat.size * 2
        + Mp * Cp * 4 + num_tiles * 8 * Cp * 4,
    )
    y_mat, stats = pl.pallas_call(
        _conv_stats_kernel,
        out_shape=(
            jax.ShapeDtypeStruct((Mp, Cp), jnp.float32),
            jax.ShapeDtypeStruct((num_tiles, 8, Cp), jnp.float32),
        ),
        grid=(num_tiles,),
        in_specs=[
            pl.BlockSpec((TM, Kp), lambda i: (i, 0)),
            pl.BlockSpec((Kp, Cp), lambda i: (0, 0)),        # resident weights
        ],
        out_specs=(
            pl.BlockSpec((TM, Cp), lambda i: (i, 0)),
            pl.BlockSpec((None, 8, Cp), lambda i: (i, 0, 0)),  # per-tile partials
        ),
        compiler_params=pltpu.CompilerParams(
            dimension_semantics=("parallel",),
            vmem_limit_bytes=_VMEM_LIMIT,
        ),
        cost_estimate=p1_cost,
    )(x_mat, w_mat)

    # ---- tiny f32 reduction of the per-tile partials (plain JAX) -------------
    totals = jnp.sum(stats, axis=0)                 # [8, Cp]
    m_true = jnp.float32(M)                         # padded rows contribute 0
    mean = totals[0] / m_true                       # [Cp]
    var = jnp.maximum(totals[1] / m_true - mean * mean, 0.0)  # biased, clamped
    inv_std = lax.rsqrt(var + _BN_EPS)

    gamma_p = jnp.pad(gamma.astype(jnp.float32), (0, Cp - Cout))
    beta_p = jnp.pad(beta.astype(jnp.float32), (0, Cp - Cout))
    scale = (gamma_p * inv_std).reshape(1, Cp)
    shift = (beta_p - mean * gamma_p * inv_std).reshape(1, Cp)

    # ---- pass 2: apply batchnorm + leaky relu, tiled over M -------------------
    p2_cost = pl.CostEstimate(
        flops=3 * Mp * Cp,
        transcendentals=0,
        bytes_accessed=2 * Mp * Cp * 4 + 2 * Cp * 4,
    )
    out_mat = pl.pallas_call(
        _bn_act_kernel,
        out_shape=jax.ShapeDtypeStruct((Mp, Cp), jnp.float32),
        grid=(num_tiles,),
        in_specs=[
            pl.BlockSpec((TM, Cp), lambda i: (i, 0)),
            pl.BlockSpec((1, Cp), lambda i: (0, 0)),
            pl.BlockSpec((1, Cp), lambda i: (0, 0)),
        ],
        out_specs=pl.BlockSpec((TM, Cp), lambda i: (i, 0)),
        compiler_params=pltpu.CompilerParams(
            dimension_semantics=("parallel",),
            vmem_limit_bytes=_VMEM_LIMIT,
        ),
        cost_estimate=p2_cost,
    )(y_mat, scale, shift)

    # Strip padding, [M, Cout] -> [N, Hout, Wout, Cout] -> NCHW.
    out = out_mat[:M, :Cout].reshape(N, Hout, Wout, Cout)
    return jnp.transpose(out, (0, 3, 1, 2))


# ---------------- pure-JAX reference (for correctness check) -----------------


def cnn_block_reference(x_nchw, weight_oihw, gamma, beta, *,
                        stride=1, padding=1, matmul_dtype=jnp.float32):
    y = lax.conv_general_dilated(
        x_nchw.astype(matmul_dtype), weight_oihw.astype(matmul_dtype),
        window_strides=(stride, stride),
        padding=((padding, padding), (padding, padding)),
        dimension_numbers=("NCHW", "OIHW", "NCHW"),
        preferred_element_type=jnp.float32,
    )
    mean = jnp.mean(y, axis=(0, 2, 3), keepdims=True)
    var = jnp.mean((y - mean) ** 2, axis=(0, 2, 3), keepdims=True)
    y_hat = (y - mean) / jnp.sqrt(var + _BN_EPS)
    z = y_hat * gamma.reshape(1, -1, 1, 1) + beta.reshape(1, -1, 1, 1)
    return jnp.where(z > 0, z, _LEAKY_SLOPE * z)


# ---------------- main --------------------------------------------------------

if __name__ == "__main__":
    # CNNBlock(in_channels=4, out_channels=8, kernel_size=3, stride=1, padding=1)
    # on NCHW input [2, 4, 16, 16]  =>  M = 2*16*16 = 512 output pixels.
    N, Cin, H, W = 2, 4, 16, 16
    Cout, K = 8, 3

    key = jax.random.PRNGKey(0)
    kx, kw = jax.random.split(key)
    x = jax.random.normal(kx, (N, Cin, H, W), dtype=jnp.float32)
    weight = 0.1 * jax.random.normal(kw, (Cout, Cin, K, K), dtype=jnp.float32)
    gamma = jnp.ones((Cout,), dtype=jnp.float32)   # BatchNorm2d default init
    beta = jnp.zeros((Cout,), dtype=jnp.float32)

    # tile_m=128 here just to exercise the multi-tile grid + partial-stat
    # reduction on this toy M=512; real shapes would use 512-2048.
    out = cnn_block_forward(x, weight, gamma, beta,
                            stride=1, padding=1, tile_m=128)
    out = jax.block_until_ready(out)
    assert out.shape == (N, Cout, H, W)

    # Tight check vs a reference with matched bf16 matmul operands.
    ref_bf16 = cnn_block_reference(x, weight, gamma, beta, stride=1, padding=1,
                                   matmul_dtype=jnp.bfloat16)
    assert jnp.max(jnp.abs(out - ref_bf16)) < 1e-3

    # Loose sanity check vs the full-f32 reference (bf16 operand rounding only).
    ref_f32 = cnn_block_reference(x, weight, gamma, beta, stride=1, padding=1,
                                  matmul_dtype=jnp.float32)
    assert jnp.max(jnp.abs(out - ref_f32)) < 3e-2

    print("KERNEL_OK")
</pallas_src>

<mosaic_0001>
module attributes {stable_mosaic.version = 11 : i64} {
  func.func @_conv_stats_kernel(%arg0: i32, %arg1: memref<128x128xbf16, #tpu.memory_space<vmem>>, %arg2: memref<128x128xbf16, #tpu.memory_space<vmem>>, %arg3: memref<128x128xf32, #tpu.memory_space<vmem>>, %arg4: memref<1x8x128xf32, #tpu.memory_space<vmem>>) attributes {dimension_semantics = [#tpu.dimension_semantics<parallel>], iteration_bounds = array<i64: 4>, scalar_prefetch = 0 : i64, scratch_operands = 0 : i64, tpu.core_type = #tpu.core_type<tc>, window_params = [{transform_indices = @transform_0, window_bounds = array<i64: 128, 128>}, {pipeline_mode = #tpu.pipeline_mode<synchronous>, transform_indices = @transform_1, window_bounds = array<i64: 128, 128>}, {transform_indices = @transform_2, window_bounds = array<i64: 128, 128>}, {transform_indices = @transform_3, window_bounds = array<i64: 1, 8, 128>}]} {
    %c0 = arith.constant 0 : index
    %c0_0 = arith.constant 0 : index
    %0 = vector.load %arg1[%c0, %c0_0] : memref<128x128xbf16, #tpu.memory_space<vmem>>, vector<128x128xbf16>
    %c0_1 = arith.constant 0 : index
    %c0_2 = arith.constant 0 : index
    %1 = vector.load %arg2[%c0_1, %c0_2] : memref<128x128xbf16, #tpu.memory_space<vmem>>, vector<128x128xbf16>
    %cst = arith.constant dense<0.000000e+00> : vector<128x128xf32>
    %2 = tpu.matmul %0, %1, %cst {dimension_numbers = #tpu.dot_dimension_numbers<[1], [0], [0], [1], [0, 0, 1, 1], [], []>} : vector<128x128xbf16>, vector<128x128xbf16>, vector<128x128xf32> -> vector<128x128xf32>
    %c0_3 = arith.constant 0 : index
    %c0_4 = arith.constant 0 : index
    %3 = vector.load %arg3[%c0_3, %c0_4] : memref<128x128xf32, #tpu.memory_space<vmem>>, vector<128x128xf32>
    tpu.vector_store %arg3[%c0_3, %c0_4], %2 {strides = array<i32>} : memref<128x128xf32, #tpu.memory_space<vmem>>, vector<128x128xf32>,
    %cst_5 = arith.constant dense<0.000000e+00> : vector<128xf32>
    %4 = vector.multi_reduction <add>, %2, %cst_5 [0] : vector<128x128xf32> to vector<128xf32>
    %5 = vector.shape_cast %4 : vector<128xf32> to vector<1x128xf32>
    %6 = arith.mulf %2, %2 : vector<128x128xf32>
    %cst_6 = arith.constant dense<0.000000e+00> : vector<128xf32>
    %7 = vector.multi_reduction <add>, %6, %cst_6 [0] : vector<128x128xf32> to vector<128xf32>
    %8 = vector.shape_cast %7 : vector<128xf32> to vector<1x128xf32>
    %cst_7 = arith.constant 0.000000e+00 : f32
    %9 = vector.broadcast %cst_7 : f32 to vector<6x128xf32>
    %10 = tpu.concatenate %5, %8, %9 in 0 : vector<1x128xf32>, vector<1x128xf32>, vector<6x128xf32> -> vector<8x128xf32>
    %c0_8 = arith.constant 0 : index
    %c0_9 = arith.constant 0 : index
    %c0_10 = arith.constant 0 : index
    %11 = vector.load %arg4[%c0_8, %c0_9, %c0_10] : memref<1x8x128xf32, #tpu.memory_space<vmem>>, vector<1x8x128xf32>
    %12 = vector.shape_cast %11 : vector<1x8x128xf32> to vector<8x128xf32>
    %13 = vector.shape_cast %10 : vector<8x128xf32> to vector<1x8x128xf32>
    tpu.vector_store %arg4[%c0_8, %c0_9, %c0_10], %13 {strides = array<i32>} : memref<1x8x128xf32, #tpu.memory_space<vmem>>, vector<1x8x128xf32>,
    return
  }
  func.func @transform_0(%arg0: i32) -> (i32, i32) {
    %c0_i32 = arith.constant 0 : i32
    %c0_i32_0 = arith.constant 0 : i32
    return %arg0, %c0_i32 : i32, i32
  }
  func.func @transform_1(%arg0: i32) -> (i32, i32) {
    %c0_i32 = arith.constant 0 : i32
    %c0_i32_0 = arith.constant 0 : i32
    %c0_i32_1 = arith.constant 0 : i32
    return %c0_i32, %c0_i32_0 : i32, i32
  }
  func.func @transform_2(%arg0: i32) -> (i32, i32) {
    %c0_i32 = arith.constant 0 : i32
    %c0_i32_0 = arith.constant 0 : i32
    return %arg0, %c0_i32 : i32, i32
  }
  func.func @transform_3(%arg0: i32) -> (i32, i32, i32) {
    %c0_i32 = arith.constant 0 : i32
    %c0_i32_0 = arith.constant 0 : i32
    %c0_i32_1 = arith.constant 0 : i32
    return %arg0, %c0_i32, %c0_i32_0 : i32, i32, i32
  }
}

module attributes {stable_mosaic.version = 11 : i64} {
  func.func @_bn_act_kernel(%arg0: i32, %arg1: memref<128x128xf32, #tpu.memory_space<vmem>>, %arg2: memref<1x128xf32, #tpu.memory_space<vmem>>, %arg3: memref<1x128xf32, #tpu.memory_space<vmem>>, %arg4: memref<128x128xf32, #tpu.memory_space<vmem>>) attributes {dimension_semantics = [#tpu.dimension_semantics<parallel>], iteration_bounds = array<i64: 4>, scalar_prefetch = 0 : i64, scratch_operands = 0 : i64, tpu.core_type = #tpu.core_type<tc>, window_params = [{transform_indices = @transform_0, window_bounds = array<i64: 128, 128>}, {pipeline_mode = #tpu.pipeline_mode<synchronous>, transform_indices = @transform_1, window_bounds = array<i64: 1, 128>}, {pipeline_mode = #tpu.pipeline_mode<synchronous>, transform_indices = @transform_2, window_bounds = array<i64: 1, 128>}, {transform_indices = @transform_3, window_bounds = array<i64: 128, 128>}]} {
    %c0 = arith.constant 0 : index
    %c0_0 = arith.constant 0 : index
    %0 = vector.load %arg1[%c0, %c0_0] : memref<128x128xf32, #tpu.memory_space<vmem>>, vector<128x128xf32>
    %c0_1 = arith.constant 0 : index
    %c0_2 = arith.constant 0 : index
    %1 = vector.load %arg2[%c0_1, %c0_2] : memref<1x128xf32, #tpu.memory_space<vmem>>, vector<1x128xf32>
    %2 = vector.broadcast %1 : vector<1x128xf32> to vector<128x128xf32>
    %3 = arith.mulf %0, %2 : vector<128x128xf32>
    %c0_3 = arith.constant 0 : index
    %c0_4 = arith.constant 0 : index
    %4 = vector.load %arg3[%c0_3, %c0_4] : memref<1x128xf32, #tpu.memory_space<vmem>>, vector<1x128xf32>
    %5 = vector.broadcast %4 : vector<1x128xf32> to vector<128x128xf32>
    %6 = arith.addf %3, %5 : vector<128x128xf32>
    %cst = arith.constant 0.000000e+00 : f32
    %7 = vector.broadcast %cst : f32 to vector<128x128xf32>
    %8 = arith.cmpf ogt, %6, %7 : vector<128x128xf32>
    %cst_5 = arith.constant 1.000000e-01 : f32
    %9 = vector.broadcast %cst_5 : f32 to vector<128x128xf32>
    %10 = arith.mulf %9, %6 : vector<128x128xf32>
    %11 = arith.select %8, %6, %10 : vector<128x128xi1>, vector<128x128xf32>
    %c0_6 = arith.constant 0 : index
    %c0_7 = arith.constant 0 : index
    %12 = vector.load %arg4[%c0_6, %c0_7] : memref<128x128xf32, #tpu.memory_space<vmem>>, vector<128x128xf32>
    tpu.vector_store %arg4[%c0_6, %c0_7], %11 {strides = array<i32>} : memref<128x128xf32, #tpu.memory_space<vmem>>, vector<128x128xf32>,
    return
  }
  func.func @transform_0(%arg0: i32) -> (i32, i32) {
    %c0_i32 = arith.constant 0 : i32
    %c0_i32_0 = arith.constant 0 : i32
    return %arg0, %c0_i32 : i32, i32
  }
  func.func @transform_1(%arg0: i32) -> (i32, i32) {
    %c0_i32 = arith.constant 0 : i32
    %c0_i32_0 = arith.constant 0 : i32
    %c0_i32_1 = arith.constant 0 : i32
    return %c0_i32, %c0_i32_0 : i32, i32
  }
  func.func @transform_2(%arg0: i32) -> (i32, i32) {
    %c0_i32 = arith.constant 0 : i32
    %c0_i32_0 = arith.constant 0 : i32
    %c0_i32_1 = arith.constant 0 : i32
    return %c0_i32, %c0_i32_0 : i32, i32
  }
  func.func @transform_3(%arg0: i32) -> (i32, i32) {
    %c0_i32 = arith.constant 0 : i32
    %c0_i32_0 = arith.constant 0 : i32
    return %arg0, %c0_i32 : i32, i32
  }
}

</mosaic_0001>

<llo_original>
// kernel: cnn_block_forward.3
$region0: #{cnn_block_forward.3}
  #allocation0 [shape = 'u32[]', space=smem, size = 0x4, offset = 0x4, fixed_abs, tag = 'smem constant byte address 0x4 - core index']
  #allocation1 [shape = 'u32[72,128]{1,0:T(1,128)}', space=vmem, size = 0x9000, scoped, tag = 'internal scratch']
  %s0 = inlined_call_operand.vmem [shape: f32[512,128], index: 0, kind: input, shape index: {}]
  %s1 = inlined_call_operand.vmem [shape: f32[1,128], index: 1, kind: input, shape index: {}]
  %s2 = inlined_call_operand.vmem [shape: f32[1,128], index: 2, kind: input, shape index: {}]
  %s3 = inlined_call_operand.vmem [shape: f32[512,128], index: 3, kind: output, shape index: {}]
  %s4 = sld [smem:[#allocation0]]
  $region45: #{cnn_block_forward.3} parent=0
    _
  %s6 = ssub.s32 1, %s4
  %s7 = scalar_select 0, %s6, %s4
  loop: start=0, step=1, limit=6
  $region2: #{cnn_block_forward.3} parent=0 // loop_pre_header
    _
  $region3: #{cnn_block_forward.3} parent=0 // loop_header
    %s9 = sphi 0, %s13
    %p10 = scmp.ge.s32.totalorder %s9, 6
    %s19 = sphi 0, %s21
    %s22 = sphi 0, %s19
    %s23 = sphi 0, %s22
    %s39 = sphi 0, %s23
    %s43 = sphi 0, %s43
    %s45 = sphi 0, %s43
    %s46 = sphi 0, %s45
    %s60 = sphi 0, %s46
    %s64 = sphi 0, %s64
    %s66 = sphi 0, %s64
    %s67 = sphi 0, %s66
    %s81 = sphi 0, %s67
    %s87 = sphi 0, %s89
    %s90 = sphi 0, %s87
    %s91 = sphi 0, %s90
    %s107 = sphi 0, %s91
  $region4: #{cnn_block_forward.3} parent=0 // loop_header_branch
    %12 = sbr.rel (%p10) target = $region8
  $region5: #{cnn_block_forward.3} parent=0 // loop_body
    %s14 = ssub.s32 %s9, 1
    %s15 = ssub.s32 %s9, 2
    %s16 = sadd.s32 %s9, 1
    %s17 = ssub.s32 %s9, %s16
    %p18 = scmp.eq.s32.totalorder %s17, 0
    %s20 = sadd.s32 %s19, 1
    %s21 = scalar_select %p18, %s19, %s20
    %p24 = pneg %p18
    %p25 = scmp.eq.s32.totalorder %s9, 3
    %p26 = por %p24, %p25
    %p27 = scmp.ne.s32.totalorder %s19, %s22
    %p28 = scmp.eq.s32.totalorder %s9, 0
    %p29 = por %p27, %p28
    %p30 = scmp.ne.s32.totalorder %s19, %s22
    %p31 = scmp.eq.s32.totalorder %s14, 3
    %p32 = por %p30, %p31
    %p33 = scmp.ne.s32.totalorder %s22, %s23
    %p34 = scmp.eq.s32.totalorder %s14, 0
    %p35 = por %p33, %p34
    %p36 = scmp.ne.s32.totalorder %s22, %s23
    %p37 = scmp.eq.s32.totalorder %s15, 3
    %p38 = por %p36, %p37
    %p40 = scmp.ne.s32.totalorder %s23, %s39
    %p41 = scmp.eq.s32.totalorder %s15, 0
    %p42 = por %p40, %p41
    %s44 = sadd.s32 %s43, 1
    %p47 = scmp.eq.s32.totalorder %s9, 3
    %p48 = scmp.ne.s32.totalorder %s43, %s45
    %p49 = scmp.eq.s32.totalorder %s9, 0
    %p50 = por %p48, %p49
    %p51 = scmp.ne.s32.totalorder %s43, %s45
    %p52 = scmp.eq.s32.totalorder %s14, 3
    %p53 = por %p51, %p52
    %p54 = scmp.ne.s32.totalorder %s45, %s46
    %p55 = scmp.eq.s32.totalorder %s14, 0
    %p56 = por %p54, %p55
    %p57 = scmp.ne.s32.totalorder %s45, %s46
    %p58 = scmp.eq.s32.totalorder %s15, 3
    %p59 = por %p57, %p58
    %p61 = scmp.ne.s32.totalorder %s46, %s60
    %p62 = scmp.eq.s32.totalorder %s15, 0
    %p63 = por %p61, %p62
    %s65 = sadd.s32 %s64, 1
    %p68 = scmp.eq.s32.totalorder %s9, 3
    %p69 = scmp.ne.s32.totalorder %s64, %s66
    %p70 = scmp.eq.s32.totalorder %s9, 0
    %p71 = por %p69, %p70
    %p72 = scmp.ne.s32.totalorder %s64, %s66
    %p73 = scmp.eq.s32.totalorder %s14, 3
    %p74 = por %p72, %p73
    %p75 = scmp.ne.s32.totalorder %s66, %s67
    %p76 = scmp.eq.s32.totalorder %s14, 0
    %p77 = por %p75, %p76
    %p78 = scmp.ne.s32.totalorder %s66, %s67
    %p79 = scmp.eq.s32.totalorder %s15, 3
    %p80 = por %p78, %p79
    %p82 = scmp.ne.s32.totalorder %s67, %s81
    %p83 = scmp.eq.s32.totalorder %s15, 0
    %p84 = por %p82, %p83
    %s85 = ssub.s32 %s9, %s16
    %p86 = scmp.eq.s32.totalorder %s85, 0
    %s88 = sadd.s32 %s87, 1
    %s89 = scalar_select %p86, %s87, %s88
    %p92 = pneg %p86
    %p93 = scmp.eq.s32.totalorder %s9, 3
    %p94 = por %p92, %p93
    %p95 = scmp.ne.s32.totalorder %s87, %s90
    %p96 = scmp.eq.s32.totalorder %s9, 0
    %p97 = por %p95, %p96
    %p98 = scmp.ne.s32.totalorder %s87, %s90
    %p99 = scmp.eq.s32.totalorder %s14, 3
    %p100 = por %p98, %p99
    %p101 = scmp.ne.s32.totalorder %s90, %s91
    %p102 = scmp.eq.s32.totalorder %s14, 0
    %p103 = por %p101, %p102
    %p104 = scmp.ne.s32.totalorder %s90, %s91
    %p105 = scmp.eq.s32.totalorder %s15, 3
    %p106 = por %p104, %p105
    %p108 = scmp.ne.s32.totalorder %s91, %s107
    %p109 = scmp.eq.s32.totalorder %s15, 0
    %p110 = por %p108, %p109
    %p111 = scmp.le.s32.totalorder 1, %s9
    %p112 = scmp.lt.s32.totalorder %s9, 5
    %p113 = pnand %p111, %p112
    %p114 = pneg %p113
    // Predicated region
    $region9: #{cnn_block_forward.3} parent=5 // pred_check
      _
    $region10: #{cnn_block_forward.3} parent=5 // pred_check_branch
      %116 = sbr.rel (%p113) target = $region12
    $region11: #{cnn_block_forward.3} parent=5 // pred_region
      %s117 = ssub.s32 %s9, 1
      // Predicated region
      $region13: #{cnn_block_forward.3} parent=11 // pred_check
        %p118 = pneg %p56
      $region14: #{cnn_block_forward.3} parent=11 // pred_check_branch
        %120 = sbr.rel (%p118) target = $region16
      $region15: #{cnn_block_forward.3} parent=11 // pred_region
        _
      $region16: #{cnn_block_forward.3} parent=11 // pred_fallthru
        _
      // Predicated region
      $region17: #{cnn_block_forward.3} parent=11 // pred_check
        %p121 = pneg %p77
      $region18: #{cnn_block_forward.3} parent=11 // pred_check_branch
        %123 = sbr.rel (%p121) target = $region20
      $region19: #{cnn_block_forward.3} parent=11 // pred_region
        _
      $region20: #{cnn_block_forward.3} parent=11 // pred_fallthru
        _
    $region12: #{cnn_block_forward.3} parent=5 // pred_fallthru
      _
    %p124 = scmp.lt.s32.totalorder %s9, 4
    // Predicated region
    $region21: #{cnn_block_forward.3} parent=5 // pred_check
      %p125 = pneg %p124
    $region22: #{cnn_block_forward.3} parent=5 // pred_check_branch
      %127 = sbr.rel (%p125) target = $region24
    $region23: #{cnn_block_forward.3} parent=5 // pred_region
      // Predicated region
      $region25: #{cnn_block_forward.3} parent=23 // pred_check
        %p128 = pneg %p29
      $region26: #{cnn_block_forward.3} parent=23 // pred_check_branch
        %130 = sbr.rel (%p128) target = $region28
      $region27: #{cnn_block_forward.3} parent=23 // pred_region
        %s131 = smul.u32 16, %s9
        %p132 = scmp.lt.s32.totalorder %s131, 63
        %s133 = scalar_select %p132, %s131, 63
        %s134 = smul.addr %s133, 8
        %s135 = scalar_lea.vmem %s0, %s134
        %s136 = smul.u32 16, %s9
      $region28: #{cnn_block_forward.3} parent=23 // pred_fallthru
        _
    $region24: #{cnn_block_forward.3} parent=5 // pred_fallthru
      _
    %p137 = scmp.le.s32.totalorder 1, %s9
    %p138 = scmp.lt.s32.totalorder %s9, 5
    %p139 = pnand %p137, %p138
    %p140 = pneg %p139
    // Predicated region
    $region29: #{cnn_block_forward.3} parent=5 // pred_check
      _
    $region30: #{cnn_block_forward.3} parent=5 // pred_check_branch
      %142 = sbr.rel (%p139) target = $region32
    $region31: #{cnn_block_forward.3} parent=5 // pred_region
      %s143 = ssub.s32 %s9, 1
      %s144 = smul.u32 16, %s14
      %p145 = scmp.lt.s32.totalorder %s144, 63
      %s146 = scalar_select %p145, %s144, 63
      %s147 = smul.addr %s146, 8
      %s148 = scalar_lea.vmem %s0, %s147
      %p149 = pneg %p35
      %p150 = pneg %p32
      %p151 = pneg %p56
      %p152 = pneg %p53
      %p153 = pneg %p77
      %p154 = pneg %p74
      %p155 = pneg %p103
      %p156 = pneg %p100
      %s157 = smul.u32 16, %s14
      %p158 = scmp.lt.s32.totalorder %s157, 63
      %s159 = scalar_select %p158, %s157, 63
      %s160 = smul.addr %s159, 8
      %s161 = scalar_lea.vmem %s3, %s160
      %s162 = smul.u32 16, %s14
      %p163 = scmp.lt.s32.totalorder %s162, 63
      %s164 = scalar_select %p163, %s162, 63
      %s165 = smul.addr %s164, 8
      %s166 = scalar_lea.vmem %s0, %s165
      %s167 = smul.u32 16, %s14
      %s168 = smul.u32 16, %s14
      %p169 = scmp.lt.s32.totalorder %s168, 63
      %s170 = scalar_select %p169, %s168, 63
      %s171 = smul.addr %s170, 8
      %s172 = scalar_lea.vmem %s3, %s171
      %s173 = smul.u32 16, %s14
      %v174 = vld [vmem:[%s166] sm:$0xff]
      %v175 = vld [vmem:[%s166 + $0x8] sm:$0xff]
      %v176 = vld [vmem:[%s166 + $0x10] sm:$0xff]
      %v177 = vld [vmem:[%s166 + $0x18] sm:$0xff]
      %v178 = vld [vmem:[%s166 + $0x20] sm:$0xff]
      %v179 = vld [vmem:[%s166 + $0x28] sm:$0xff]
      %v180 = vld [vmem:[%s166 + $0x30] sm:$0xff]
      %v181 = vld [vmem:[%s166 + $0x38] sm:$0xff]
      %v182 = vld [vmem:[%s166 + $0x40] sm:$0xff]
      %v183 = vld [vmem:[%s166 + $0x48] sm:$0xff]
      %v184 = vld [vmem:[%s166 + $0x50] sm:$0xff]
      %v185 = vld [vmem:[%s166 + $0x58] sm:$0xff]
      %v186 = vld [vmem:[%s166 + $0x60] sm:$0xff]
      %v187 = vld [vmem:[%s166 + $0x68] sm:$0xff]
      %v188 = vld [vmem:[%s166 + $0x70] sm:$0xff]
      %v189 = vld [vmem:[%s166 + $0x78] sm:$0xff]
      %v190 = vld [vmem:[%s1] sm:$0x1]
      %v192 = vperm.slane %v190, 0
      %v194 = vmul.f32 %v174, %v192
      %v195 = vmul.f32 %v175, %v192
      %v196 = vmul.f32 %v176, %v192
      %v197 = vmul.f32 %v177, %v192
      %v198 = vmul.f32 %v178, %v192
      %v199 = vmul.f32 %v179, %v192
      %v200 = vmul.f32 %v180, %v192
      %v201 = vmul.f32 %v181, %v192
      %v202 = vmul.f32 %v182, %v192
      %v203 = vmul.f32 %v183, %v192
      %v204 = vmul.f32 %v184, %v192
      %v205 = vmul.f32 %v185, %v192
      %v206 = vmul.f32 %v186, %v192
      %v207 = vmul.f32 %v187, %v192
      %v208 = vmul.f32 %v188, %v192
      %v209 = vmul.f32 %v189, %v192
      %v210 = vld [vmem:[%s2] sm:$0x1]
      %v212 = vperm.slane %v210, 0
      %v214 = vadd.f32 %v194, %v212
      %v215 = vadd.f32 %v195, %v212
      %v216 = vadd.f32 %v196, %v212
      %v217 = vadd.f32 %v197, %v212
      %v218 = vadd.f32 %v198, %v212
      %v219 = vadd.f32 %v199, %v212
      %v220 = vadd.f32 %v200, %v212
      %v221 = vadd.f32 %v201, %v212
      %v222 = vadd.f32 %v202, %v212
      %v223 = vadd.f32 %v203, %v212
      %v224 = vadd.f32 %v204, %v212
      %v225 = vadd.f32 %v205, %v212
      %v226 = vadd.f32 %v206, %v212
      %v227 = vadd.f32 %v207, %v212
      %v228 = vadd.f32 %v208, %v212
      %v229 = vadd.f32 %v209, %v212
      %vm230 = vcmp.gt.f32.partialorder %v214, 0.0
      %vm231 = vcmp.gt.f32.partialorder %v215, 0.0
      %vm232 = vcmp.gt.f32.partialorder %v216, 0.0
      %vm233 = vcmp.gt.f32.partialorder %v217, 0.0
      %vm234 = vcmp.gt.f32.partialorder %v218, 0.0
      %vm235 = vcmp.gt.f32.partialorder %v219, 0.0
      %vm236 = vcmp.gt.f32.partialorder %v220, 0.0
      %vm237 = vcmp.gt.f32.partialorder %v221, 0.0
      %vm238 = vcmp.gt.f32.partialorder %v222, 0.0
      %vm239 = vcmp.gt.f32.partialorder %v223, 0.0
      %vm240 = vcmp.gt.f32.partialorder %v224, 0.0
      %vm241 = vcmp.gt.f32.partialorder %v225, 0.0
      %vm242 = vcmp.gt.f32.partialorder %v226, 0.0
      %vm243 = vcmp.gt.f32.partialorder %v227, 0.0
      %vm244 = vcmp.gt.f32.partialorder %v228, 0.0
      %vm245 = vcmp.gt.f32.partialorder %v229, 0.0
      %v246 = vmul.f32 %v214, 0.1
      %v247 = vmul.f32 %v215, 0.1
      %v248 = vmul.f32 %v216, 0.1
      %v249 = vmul.f32 %v217, 0.1
      %v250 = vmul.f32 %v218, 0.1
      %v251 = vmul.f32 %v219, 0.1
      %v252 = vmul.f32 %v220, 0.1
      %v253 = vmul.f32 %v221, 0.1
      %v254 = vmul.f32 %v222, 0.1
      %v255 = vmul.f32 %v223, 0.1
      %v256 = vmul.f32 %v224, 0.1
      %v257 = vmul.f32 %v225, 0.1
      %v258 = vmul.f32 %v226, 0.1
      %v259 = vmul.f32 %v227, 0.1
      %v260 = vmul.f32 %v228, 0.1
      %v261 = vmul.f32 %v229, 0.1
      %v262 = vsel %vm230, %v214, %v246
      %v263 = vsel %vm231, %v215, %v247
      %v264 = vsel %vm232, %v216, %v248
      %v265 = vsel %vm233, %v217, %v249
      %v266 = vsel %vm234, %v218, %v250
      %v267 = vsel %vm235, %v219, %v251
      %v268 = vsel %vm236, %v220, %v252
      %v269 = vsel %vm237, %v221, %v253
      %v270 = vsel %vm238, %v222, %v254
      %v271 = vsel %vm239, %v223, %v255
      %v272 = vsel %vm240, %v224, %v256
      %v273 = vsel %vm241, %v225, %v257
      %v274 = vsel %vm242, %v226, %v258
      %v275 = vsel %vm243, %v227, %v259
      %v276 = vsel %vm244, %v228, %v260
      %v277 = vsel %vm245, %v229, %v261
      %278 = vst [vmem:[%s172] sm:$0xff] %v262
      %279 = vst [vmem:[%s172 + $0x8] sm:$0xff] %v263
      %280 = vst [vmem:[%s172 + $0x10] sm:$0xff] %v264
      %281 = vst [vmem:[%s172 + $0x18] sm:$0xff] %v265
      %282 = vst [vmem:[%s172 + $0x20] sm:$0xff] %v266
      %283 = vst [vmem:[%s172 + $0x28] sm:$0xff] %v267
      %284 = vst [vmem:[%s172 + $0x30] sm:$0xff] %v268
      %285 = vst [vmem:[%s172 + $0x38] sm:$0xff] %v269
      %286 = vst [vmem:[%s172 + $0x40] sm:$0xff] %v270
      %287 = vst [vmem:[%s172 + $0x48] sm:$0xff] %v271
      %288 = vst [vmem:[%s172 + $0x50] sm:$0xff] %v272
      %289 = vst [vmem:[%s172 + $0x58] sm:$0xff] %v273
      %290 = vst [vmem:[%s172 + $0x60] sm:$0xff] %v274
      %291 = vst [vmem:[%s172 + $0x68] sm:$0xff] %v275
      %292 = vst [vmem:[%s172 + $0x70] sm:$0xff] %v276
      %293 = vst [vmem:[%s172 + $0x78] sm:$0xff] %v277
      %s294 = smul.u32 16, %s14
      %p295 = scmp.lt.s32.totalorder %s294, 63
      %s296 = scalar_select %p295, %s294, 63
      %s297 = smul.addr %s296, 8
      %s298 = scalar_lea.vmem %s3, %s297
      // Predicated region
      $region33: #{cnn_block_forward.3} parent=31 // pred_check
        %p299 = pneg %p100
      $region34: #{cnn_block_forward.3} parent=31 // pred_check_branch
        %301 = sbr.rel (%p299) target = $region36
      $region35: #{cnn_block_forward.3} parent=31 // pred_region
        %s302 = smul.u32 16, %s14
      $region36: #{cnn_block_forward.3} parent=31 // pred_fallthru
        _
    $region32: #{cnn_block_forward.3} parent=5 // pred_fallthru
      _
    %p303 = scmp.le.s32.totalorder 2, %s9
    // Predicated region
    $region37: #{cnn_block_forward.3} parent=5 // pred_check
      %p304 = pneg %p303
    $region38: #{cnn_block_forward.3} parent=5 // pred_check_branch
      %306 = sbr.rel (%p304) target = $region40
    $region39: #{cnn_block_forward.3} parent=5 // pred_region
      %s307 = ssub.s32 %s9, 2
      // Predicated region
      $region41: #{cnn_block_forward.3} parent=39 // pred_check
        %p308 = pneg %p106
      $region42: #{cnn_block_forward.3} parent=39 // pred_check_branch
        %310 = sbr.rel (%p308) target = $region44
      $region43: #{cnn_block_forward.3} parent=39 // pred_region
        %s311 = smul.u32 16, %s15
        %p312 = scmp.lt.s32.totalorder %s311, 63
        %s313 = scalar_select %p312, %s311, 63
        %s314 = smul.addr %s313, 8
        %s315 = scalar_lea.vmem %s3, %s314
      $region44: #{cnn_block_forward.3} parent=39 // pred_fallthru
        _
    $region40: #{cnn_block_forward.3} parent=5 // pred_fallthru
      _
  $region6: #{cnn_block_forward.3} parent=0 // loop_footer
    %s13 = sadd.s32 1, %s9
  $region7: #{cnn_block_forward.3} parent=0 // loop_footer_branch
    %8 = sbr.rel target = $region3
  $region8: #{cnn_block_forward.3} parent=0 // loop_exit
    _

// kernel: cnn_block_forward.2
$region0: #{cnn_block_forward.2}
  #allocation0 [shape = 'u32[]', space=smem, size = 0x4, offset = 0x4, fixed_abs, tag = 'smem constant byte address 0x4 - core index']
  #allocation1 [shape = 'u32[72,128]{1,0:T(1,128)}', space=vmem, size = 0x9000, scoped, tag = 'internal scratch']
  %s0 = inlined_call_operand.vmem [shape: bf16[512,128], index: 0, kind: input, shape index: {}]
  %s1 = inlined_call_operand.vmem [shape: bf16[128,128], index: 1, kind: input, shape index: {}]
  %s2 = inlined_call_operand.vmem [shape: f32[512,128], index: 2, kind: output, shape index: {0}]
  %s3 = inlined_call_operand.vmem [shape: f32[4,8,128], index: 3, kind: output, shape index: {1}]
  %4 = xla_tuple %s2, %s3
  %s5 = sld [smem:[#allocation0]]
  $region49: #{cnn_block_forward.2} parent=0
    _
  %s7 = ssub.s32 1, %s5
  %s8 = scalar_select 0, %s7, %s5
  loop: start=0, step=1, limit=6
  $region2: #{cnn_block_forward.2} parent=0 // loop_pre_header
    _
  $region3: #{cnn_block_forward.2} parent=0 // loop_header
    %s10 = sphi 0, %s14
    %p11 = scmp.ge.s32.totalorder %s10, 6
    %s20 = sphi 0, %s22
    %s23 = sphi 0, %s20
    %s24 = sphi 0, %s23
    %s40 = sphi 0, %s24
    %s44 = sphi 0, %s44
    %s46 = sphi 0, %s44
    %s47 = sphi 0, %s46
    %s61 = sphi 0, %s47
    %s67 = sphi 0, %s69
    %s70 = sphi 0, %s67
    %s71 = sphi 0, %s70
    %s87 = sphi 0, %s71
    %s93 = sphi 0, %s95
    %s96 = sphi 0, %s93
    %s97 = sphi 0, %s96
    %s113 = sphi 0, %s97
  $region4: #{cnn_block_forward.2} parent=0 // loop_header_branch
    %13 = sbr.rel (%p11) target = $region8
  $region5: #{cnn_block_forward.2} parent=0 // loop_body
    %s15 = ssub.s32 %s10, 1
    %s16 = ssub.s32 %s10, 2
    %s17 = sadd.s32 %s10, 1
    %s18 = ssub.s32 %s10, %s17
    %p19 = scmp.eq.s32.totalorder %s18, 0
    %s21 = sadd.s32 %s20, 1
    %s22 = scalar_select %p19, %s20, %s21
    %p25 = pneg %p19
    %p26 = scmp.eq.s32.totalorder %s10, 3
    %p27 = por %p25, %p26
    %p28 = scmp.ne.s32.totalorder %s20, %s23
    %p29 = scmp.eq.s32.totalorder %s10, 0
    %p30 = por %p28, %p29
    %p31 = scmp.ne.s32.totalorder %s20, %s23
    %p32 = scmp.eq.s32.totalorder %s15, 3
    %p33 = por %p31, %p32
    %p34 = scmp.ne.s32.totalorder %s23, %s24
    %p35 = scmp.eq.s32.totalorder %s15, 0
    %p36 = por %p34, %p35
    %p37 = scmp.ne.s32.totalorder %s23, %s24
    %p38 = scmp.eq.s32.totalorder %s16, 3
    %p39 = por %p37, %p38
    %p41 = scmp.ne.s32.totalorder %s24, %s40
    %p42 = scmp.eq.s32.totalorder %s16, 0
    %p43 = por %p41, %p42
    %s45 = sadd.s32 %s44, 1
    %p48 = scmp.eq.s32.totalorder %s10, 3
    %p49 = scmp.ne.s32.totalorder %s44, %s46
    %p50 = scmp.eq.s32.totalorder %s10, 0
    %p51 = por %p49, %p50
    %p52 = scmp.ne.s32.totalorder %s44, %s46
    %p53 = scmp.eq.s32.totalorder %s15, 3
    %p54 = por %p52, %p53
    %p55 = scmp.ne.s32.totalorder %s46, %s47
    %p56 = scmp.eq.s32.totalorder %s15, 0
    %p57 = por %p55, %p56
    %p58 = scmp.ne.s32.totalorder %s46, %s47
    %p59 = scmp.eq.s32.totalorder %s16, 3
    %p60 = por %p58, %p59
    %p62 = scmp.ne.s32.totalorder %s47, %s61
    %p63 = scmp.eq.s32.totalorder %s16, 0
    %p64 = por %p62, %p63
    %s65 = ssub.s32 %s10, %s17
    %p66 = scmp.eq.s32.totalorder %s65, 0
    %s68 = sadd.s32 %s67, 1
    %s69 = scalar_select %p66, %s67, %s68
    %p72 = pneg %p66
    %p73 = scmp.eq.s32.totalorder %s10, 3
    %p74 = por %p72, %p73
    %p75 = scmp.ne.s32.totalorder %s67, %s70
    %p76 = scmp.eq.s32.totalorder %s10, 0
    %p77 = por %p75, %p76
    %p78 = scmp.ne.s32.totalorder %s67, %s70
    %p79 = scmp.eq.s32.totalorder %s15, 3
    %p80 = por %p78, %p79
    %p81 = scmp.ne.s32.totalorder %s70, %s71
    %p82 = scmp.eq.s32.totalorder %s15, 0
    %p83 = por %p81, %p82
    %p84 = scmp.ne.s32.totalorder %s70, %s71
    %p85 = scmp.eq.s32.totalorder %s16, 3
    %p86 = por %p84, %p85
    %p88 = scmp.ne.s32.totalorder %s71, %s87
    %p89 = scmp.eq.s32.totalorder %s16, 0
    %p90 = por %p88, %p89
    %s91 = ssub.s32 %s10, %s17
    %p92 = scmp.eq.s32.totalorder %s91, 0
    %s94 = sadd.s32 %s93, 1
    %s95 = scalar_select %p92, %s93, %s94
    %p98 = pneg %p92
    %p99 = scmp.eq.s32.totalorder %s10, 3
    %p100 = por %p98, %p99
    %p101 = scmp.ne.s32.totalorder %s93, %s96
    %p102 = scmp.eq.s32.totalorder %s10, 0
    %p103 = por %p101, %p102
    %p104 = scmp.ne.s32.totalorder %s93, %s96
    %p105 = scmp.eq.s32.totalorder %s15, 3
    %p106 = por %p104, %p105
    %p107 = scmp.ne.s32.totalorder %s96, %s97
    %p108 = scmp.eq.s32.totalorder %s15, 0
    %p109 = por %p107, %p108
    %p110 = scmp.ne.s32.totalorder %s96, %s97
    %p111 = scmp.eq.s32.totalorder %s16, 3
    %p112 = por %p110, %p111
    %p114 = scmp.ne.s32.totalorder %s97, %s113
    %p115 = scmp.eq.s32.totalorder %s16, 0
    %p116 = por %p114, %p115
    %p117 = scmp.le.s32.totalorder 1, %s10
    %p118 = scmp.lt.s32.totalorder %s10, 5
    %p119 = pnand %p117, %p118
    %p120 = pneg %p119
    // Predicated region
    $region9: #{cnn_block_forward.2} parent=5 // pred_check
      _
    $region10: #{cnn_block_forward.2} parent=5 // pred_check_branch
      %122 = sbr.rel (%p119) target = $region12
    $region11: #{cnn_block_forward.2} parent=5 // pred_region
      %s123 = ssub.s32 %s10, 1
      // Predicated region
      $region13: #{cnn_block_forward.2} parent=11 // pred_check
        %p124 = pneg %p57
      $region14: #{cnn_block_forward.2} parent=11 // pred_check_branch
        %126 = sbr.rel (%p124) target = $region16
      $region15: #{cnn_block_forward.2} parent=11 // pred_region
        _
      $region16: #{cnn_block_forward.2} parent=11 // pred_fallthru
        _
    $region12: #{cnn_block_forward.2} parent=5 // pred_fallthru
      _
    %p127 = scmp.lt.s32.totalorder %s10, 4
    // Predicated region
    $region17: #{cnn_block_forward.2} parent=5 // pred_check
      %p128 = pneg %p127
    $region18: #{cnn_block_forward.2} parent=5 // pred_check_branch
      %130 = sbr.rel (%p128) target = $region20
    $region19: #{cnn_block_forward.2} parent=5 // pred_region
      // Predicated region
      $region21: #{cnn_block_forward.2} parent=19 // pred_check
        %p131 = pneg %p30
      $region22: #{cnn_block_forward.2} parent=19 // pred_check_branch
        %133 = sbr.rel (%p131) target = $region24
      $region23: #{cnn_block_forward.2} parent=19 // pred_region
        %s134 = smul.u32 16, %s10
        %p135 = scmp.lt.s32.totalorder %s134, 63
        %s136 = scalar_select %p135, %s134, 63
        %s137 = smul.addr %s136, 4
        %s138 = scalar_lea.vmem %s0, %s137
        %s139 = smul.u32 16, %s10
      $region24: #{cnn_block_forward.2} parent=19 // pred_fallthru
        _
    $region20: #{cnn_block_forward.2} parent=5 // pred_fallthru
      _
    %p140 = scmp.le.s32.totalorder 1, %s10
    %p141 = scmp.lt.s32.totalorder %s10, 5
    %p142 = pnand %p140, %p141
    %p143 = pneg %p142
    // Predicated region
    $region25: #{cnn_block_forward.2} parent=5 // pred_check
      _
    $region26: #{cnn_block_forward.2} parent=5 // pred_check_branch
      %145 = sbr.rel (%p142) target = $region28
    $region27: #{cnn_block_forward.2} parent=5 // pred_region
      %s146 = ssub.s32 %s10, 1
      %s147 = smul.u32 16, %s15
      %p148 = scmp.lt.s32.totalorder %s147, 63
      %s149 = scalar_select %p148, %s147, 63
      %s150 = smul.addr %s149, 4
      %s151 = scalar_lea.vmem %s0, %s150
      %p152 = pneg %p36
      %p153 = pneg %p33
      %p154 = pneg %p57
      %p155 = pneg %p54
      %p156 = pneg %p83
      %p157 = pneg %p80
      %s158 = smul.u32 16, %s15
      %p159 = scmp.lt.s32.totalorder %s158, 63
      %s160 = scalar_select %p159, %s158, 63
      %s161 = smul.addr %s160, 8
      %s162 = scalar_lea.vmem %s2, %s161
      %p163 = pneg %p109
      %p164 = pneg %p106
      %p165 = scmp.lt.s32.totalorder %s15, 3
      %s166 = scalar_select %p165, %s15, 3
      %s167 = smul.addr %s166, 8
      %s168 = scalar_lea.vmem %s3, %s167
      %s169 = smul.u32 16, %s15
      %p170 = scmp.lt.s32.totalorder %s169, 63
      %s171 = scalar_select %p170, %s169, 63
      %s172 = smul.addr %s171, 4
      %s173 = scalar_lea.vmem %s0, %s172
      %s174 = smul.u32 16, %s15
      %s175 = smul.u32 16, %s15
      %p176 = scmp.lt.s32.totalorder %s175, 63
      %s177 = scalar_select %p176, %s175, 63
      %s178 = smul.addr %s177, 8
      %s179 = scalar_lea.vmem %s2, %s178
      %s180 = smul.u32 16, %s15
      %p181 = scmp.lt.s32.totalorder %s15, 3
      %s182 = scalar_select %p181, %s15, 3
      %s183 = smul.addr %s182, 8
      %s184 = scalar_lea.vmem %s3, %s183
      %v185 = vld [vmem:[%s173] sm:$0xf]
      %v186 = vld [vmem:[%s173 + $0x4] sm:$0xf]
      %v187 = vld [vmem:[%s173 + $0x8] sm:$0xf]
      %v188 = vld [vmem:[%s173 + $0xc] sm:$0xf]
      %v189 = vld [vmem:[%s173 + $0x10] sm:$0xf]
      %v190 = vld [vmem:[%s173 + $0x14] sm:$0xf]
      %v191 = vld [vmem:[%s173 + $0x18] sm:$0xf]
      %v192 = vld [vmem:[%s173 + $0x1c] sm:$0xf]
      %v193 = vld [vmem:[%s173 + $0x20] sm:$0xf]
      %v194 = vld [vmem:[%s173 + $0x24] sm:$0xf]
      %v195 = vld [vmem:[%s173 + $0x28] sm:$0xf]
      %v196 = vld [vmem:[%s173 + $0x2c] sm:$0xf]
      %v197 = vld [vmem:[%s173 + $0x30] sm:$0xf]
      %v198 = vld [vmem:[%s173 + $0x34] sm:$0xf]
      %v199 = vld [vmem:[%s173 + $0x38] sm:$0xf]
      %v200 = vld [vmem:[%s173 + $0x3c] sm:$0xf]
      %v201 = vld [vmem:[%s1] sm:$0xf]
      %v202 = vld [vmem:[%s1 + $0x4] sm:$0xf]
      %v203 = vld [vmem:[%s1 + $0x8] sm:$0xf]
      %v204 = vld [vmem:[%s1 + $0xc] sm:$0xf]
      %v205 = vld [vmem:[%s1 + $0x10] sm:$0xf]
      %v206 = vld [vmem:[%s1 + $0x14] sm:$0xf]
      %v207 = vld [vmem:[%s1 + $0x18] sm:$0xf]
      %v208 = vld [vmem:[%s1 + $0x1c] sm:$0xf]
      %v209 = vld [vmem:[%s1 + $0x20] sm:$0xf]
      %v210 = vld [vmem:[%s1 + $0x24] sm:$0xf]
      %v211 = vld [vmem:[%s1 + $0x28] sm:$0xf]
      %v212 = vld [vmem:[%s1 + $0x2c] sm:$0xf]
      %v213 = vld [vmem:[%s1 + $0x30] sm:$0xf]
      %v214 = vld [vmem:[%s1 + $0x34] sm:$0xf]
      %v215 = vld [vmem:[%s1 + $0x38] sm:$0xf]
      %v216 = vld [vmem:[%s1 + $0x3c] sm:$0xf]
      %v233 = vunpack.c.l.b16 %v185
      %v234 = vunpack.c.l.b16 %v186
      %v235 = vunpack.c.l.b16 %v187
      %v236 = vunpack.c.l.b16 %v188
      %v237 = vunpack.c.l.b16 %v189
      %v238 = vunpack.c.l.b16 %v190
      %v239 = vunpack.c.l.b16 %v191
      %v240 = vunpack.c.l.b16 %v192
      %v241 = vunpack.c.l.b16 %v193
      %v242 = vunpack.c.l.b16 %v194
      %v243 = vunpack.c.l.b16 %v195
      %v244 = vunpack.c.l.b16 %v196
      %v245 = vunpack.c.l.b16 %v197
      %v246 = vunpack.c.l.b16 %v198
      %v247 = vunpack.c.l.b16 %v199
      %v248 = vunpack.c.l.b16 %v200
      %v249 = vpack.c.b16 %v234, %v233
      %v250 = vpack.c.b16 %v236, %v235
      %v251 = vpack.c.b16 %v238, %v237
      %v252 = vpack.c.b16 %v240, %v239
      %v253 = vpack.c.b16 %v242, %v241
      %v254 = vpack.c.b16 %v244, %v243
      %v255 = vpack.c.b16 %v246, %v245
      %v256 = vpack.c.b16 %v248, %v247
      %v281 = vunpack.c.l.b16 %v201
      %v282 = vunpack.c.l.b16 %v202
      %v283 = vunpack.c.l.b16 %v203
      %v284 = vunpack.c.l.b16 %v204
      %v285 = vunpack.c.l.b16 %v205
      %v286 = vunpack.c.l.b16 %v206
      %v287 = vunpack.c.l.b16 %v207
      %v288 = vunpack.c.l.b16 %v208
      %v289 = vunpack.c.l.b16 %v209
      %v290 = vunpack.c.l.b16 %v210
      %v291 = vunpack.c.l.b16 %v211
      %v292 = vunpack.c.l.b16 %v212
      %v293 = vunpack.c.l.b16 %v213
      %v294 = vunpack.c.l.b16 %v214
      %v295 = vunpack.c.l.b16 %v215
      %v296 = vunpack.c.l.b16 %v216
      %v297 = vpack.c.b16 %v282, %v281
      %v298 = vpack.c.b16 %v284, %v283
      %v299 = vpack.c.b16 %v286, %v285
      %v300 = vpack.c.b16 %v288, %v287
      %v301 = vpack.c.b16 %v290, %v289
      %v302 = vpack.c.b16 %v292, %v291
      %v303 = vpack.c.b16 %v294, %v293
      %v304 = vpack.c.b16 %v296, %v295
      %313 = vmatpush.bf16.msra.mxu0 %v304
      %314 = vmatpush.bf16.msra.mxu0 %v303
      %315 = vmatpush.bf16.msra.mxu0 %v302
      %316 = vmatpush.bf16.msra.mxu0 %v301
      %317 = vmatpush.bf16.msra.mxu0 %v300
      %318 = vmatpush.bf16.msra.mxu0 %v299
      %319 = vmatpush.bf16.msra.mxu0 %v298
      %320 = vmatpush.bf16.msra.mxu0 %v297
      %321 = vmatmul.bf16.gmra.mxu0 %v249
      %v322 = vpop.f32.mrf.mxu0
      %v323 = vadd.f32 0.0, %v322
      %v324 = vpop.f32.mrf.mxu0
      %v325 = vadd.f32 0.0, %v324
      %326 = vmatmul.bf16.gmra.mxu0 %v250
      %v327 = vpop.f32.mrf.mxu0
      %v328 = vadd.f32 0.0, %v327
      %v329 = vpop.f32.mrf.mxu0
      %v330 = vadd.f32 0.0, %v329
      %331 = vmatmul.bf16.gmra.mxu0 %v251
      %v332 = vpop.f32.mrf.mxu0
      %v333 = vadd.f32 0.0, %v332
      %v334 = vpop.f32.mrf.mxu0
      %v335 = vadd.f32 0.0, %v334
      %336 = vmatmul.bf16.gmra.mxu0 %v252
      %v337 = vpop.f32.mrf.mxu0
      %v338 = vadd.f32 0.0, %v337
      %v339 = vpop.f32.mrf.mxu0
      %v340 = vadd.f32 0.0, %v339
      %341 = vmatmul.bf16.gmra.mxu0 %v253
      %v342 = vpop.f32.mrf.mxu0
      %v343 = vadd.f32 0.0, %v342
      %v344 = vpop.f32.mrf.mxu0
      %v345 = vadd.f32 0.0, %v344
      %346 = vmatmul.bf16.gmra.mxu0 %v254
      %v347 = vpop.f32.mrf.mxu0
      %v348 = vadd.f32 0.0, %v347
      %v349 = vpop.f32.mrf.mxu0
      %v350 = vadd.f32 0.0, %v349
      %351 = vmatmul.bf16.gmra.mxu0 %v255
      %v352 = vpop.f32.mrf.mxu0
      %v353 = vadd.f32 0.0, %v352
      %v354 = vpop.f32.mrf.mxu0
      %v355 = vadd.f32 0.0, %v354
      %356 = vmatmul.bf16.gmra.mxu0 %v256
      %v357 = vpop.f32.mrf.mxu0
      %v358 = vadd.f32 0.0, %v357
      %v359 = vpop.f32.mrf.mxu0
      %v360 = vadd.f32 0.0, %v359
      %361 = vdwg.mxu0
      %362 = vst [vmem:[%s179] sm:$0xff] %v323
      %363 = vst [vmem:[%s179 + $0x8] sm:$0xff] %v325
      %364 = vst [vmem:[%s179 + $0x10] sm:$0xff] %v328
      %365 = vst [vmem:[%s179 + $0x18] sm:$0xff] %v330
      %366 = vst [vmem:[%s179 + $0x20] sm:$0xff] %v333
      %367 = vst [vmem:[%s179 + $0x28] sm:$0xff] %v335
      %368 = vst [vmem:[%s179 + $0x30] sm:$0xff] %v338
      %369 = vst [vmem:[%s179 + $0x38] sm:$0xff] %v340
      %370 = vst [vmem:[%s179 + $0x40] sm:$0xff] %v343
      %371 = vst [vmem:[%s179 + $0x48] sm:$0xff] %v345
      %372 = vst [vmem:[%s179 + $0x50] sm:$0xff] %v348
      %373 = vst [vmem:[%s179 + $0x58] sm:$0xff] %v350
      %374 = vst [vmem:[%s179 + $0x60] sm:$0xff] %v353
      %375 = vst [vmem:[%s179 + $0x68] sm:$0xff] %v355
      %376 = vst [vmem:[%s179 + $0x70] sm:$0xff] %v358
      %377 = vst [vmem:[%s179 + $0x78] sm:$0xff] %v360
      %v378 = vadd.f32 %v323, %v325
      %v379 = vadd.f32 %v378, %v328
      %v380 = vadd.f32 %v379, %v330
      %v381 = vadd.f32 %v380, %v333
      %v382 = vadd.f32 %v381, %v335
      %v383 = vadd.f32 %v382, %v338
      %v384 = vadd.f32 %v383, %v340
      %v385 = vadd.f32 %v384, %v343
      %v386 = vadd.f32 %v385, %v345
      %v387 = vadd.f32 %v386, %v348
      %v388 = vadd.f32 %v387, %v350
      %v389 = vadd.f32 %v388, %v353
      %v390 = vadd.f32 %v389, %v355
      %v391 = vadd.f32 %v390, %v358
      %v392 = vadd.f32 %v391, %v360
      %v393 = vrot.slane %v392, 4
      %v394 = vadd.f32 %v392, %v393
      %v395 = vrot.slane %v394, 2
      %v396 = vadd.f32 %v394, %v395
      %v397 = vrot.slane %v396, 1
      %v398 = vadd.f32 %v396, %v397
      %v399 = vmul.f32 %v323, %v323
      %v400 = vmul.f32 %v325, %v325
      %v401 = vmul.f32 %v328, %v328
      %v402 = vmul.f32 %v330, %v330
      %v403 = vmul.f32 %v333, %v333
      %v404 = vmul.f32 %v335, %v335
      %v405 = vmul.f32 %v338, %v338
      %v406 = vmul.f32 %v340, %v340
      %v407 = vmul.f32 %v343, %v343
      %v408 = vmul.f32 %v345, %v345
      %v409 = vmul.f32 %v348, %v348
      %v410 = vmul.f32 %v350, %v350
      %v411 = vmul.f32 %v353, %v353
      %v412 = vmul.f32 %v355, %v355
      %v413 = vmul.f32 %v358, %v358
      %v414 = vmul.f32 %v360, %v360
      %v415 = vadd.f32 %v399, %v400
      %v416 = vadd.f32 %v415, %v401
      %v417 = vadd.f32 %v416, %v402
      %v418 = vadd.f32 %v417, %v403
      %v419 = vadd.f32 %v418, %v404
      %v420 = vadd.f32 %v419, %v405
      %v421 = vadd.f32 %v420, %v406
      %v422 = vadd.f32 %v421, %v407
      %v423 = vadd.f32 %v422, %v408
      %v424 = vadd.f32 %v423, %v409
      %v425 = vadd.f32 %v424, %v410
      %v426 = vadd.f32 %v425, %v411
      %v427 = vadd.f32 %v426, %v412
      %v428 = vadd.f32 %v427, %v413
      %v429 = vadd.f32 %v428, %v414
      %v430 = vrot.slane %v429, 4
      %v431 = vadd.f32 %v429, %v430
      %v432 = vrot.slane %v431, 2
      %v433 = vadd.f32 %v431, %v432
      %v434 = vrot.slane %v433, 1
      %v435 = vadd.f32 %v433, %v434
      %vm436 = vcmask 1040384
      %v437 = vsel %vm436, %v398, %v435
      %vm438 = vcmask 1041408
      %v439 = vsel %vm438, %v437, 0.0
      %440 = vst [vmem:[%s184] sm:$0xff] %v439
      %s441 = smul.u32 16, %s15
      %p442 = scmp.lt.s32.totalorder %s441, 63
      %s443 = scalar_select %p442, %s441, 63
      %s444 = smul.addr %s443, 8
      %s445 = scalar_lea.vmem %s2, %s444
      %p446 = scmp.lt.s32.totalorder %s15, 3
      %s447 = scalar_select %p446, %s15, 3
      %s448 = smul.addr %s447, 8
      %s449 = scalar_lea.vmem %s3, %s448
      // Predicated region
      $region29: #{cnn_block_forward.2} parent=27 // pred_check
        %p450 = pneg %p80
      $region30: #{cnn_block_forward.2} parent=27 // pred_check_branch
        %452 = sbr.rel (%p450) target = $region32
      $region31: #{cnn_block_forward.2} parent=27 // pred_region
        %s453 = smul.u32 16, %s15
      $region32: #{cnn_block_forward.2} parent=27 // pred_fallthru
        _
      // Predicated region
      $region33: #{cnn_block_forward.2} parent=27 // pred_check
        %p454 = pneg %p106
      $region34: #{cnn_block_forward.2} parent=27 // pred_check_branch
        %456 = sbr.rel (%p454) target = $region36
      $region35: #{cnn_block_forward.2} parent=27 // pred_region
        _
      $region36: #{cnn_block_forward.2} parent=27 // pred_fallthru
        _
    $region28: #{cnn_block_forward.2} parent=5 // pred_fallthru
      _
    %p457 = scmp.le.s32.totalorder 2, %s10
    // Predicated region
    $region37: #{cnn_block_forward.2} parent=5 // pred_check
      %p458 = pneg %p457
    $region38: #{cnn_block_forward.2} parent=5 // pred_check_branch
      %460 = sbr.rel (%p458) target = $region40
    $region39: #{cnn_block_forward.2} parent=5 // pred_region
      %s461 = ssub.s32 %s10, 2
      // Predicated region
      $region41: #{cnn_block_forward.2} parent=39 // pred_check
        %p462 = pneg %p86
      $region42: #{cnn_block_forward.2} parent=39 // pred_check_branch
        %464 = sbr.rel (%p462) target = $region44
      $region43: #{cnn_block_forward.2} parent=39 // pred_region
        %s465 = smul.u32 16, %s16
        %p466 = scmp.lt.s32.totalorder %s465, 63
        %s467 = scalar_select %p466, %s465, 63
        %s468 = smul.addr %s467, 8
        %s469 = scalar_lea.vmem %s2, %s468
      $region44: #{cnn_block_forward.2} parent=39 // pred_fallthru
        _
      // Predicated region
      $region45: #{cnn_block_forward.2} parent=39 // pred_check
        %p470 = pneg %p112
      $region46: #{cnn_block_forward.2} parent=39 // pred_check_branch
        %472 = sbr.rel (%p470) target = $region48
      $region47: #{cnn_block_forward.2} parent=39 // pred_region
        %p473 = scmp.lt.s32.totalorder %s16, 3
        %s474 = scalar_select %p473, %s16, 3
        %s475 = smul.addr %s474, 8
        %s476 = scalar_lea.vmem %s3, %s475
      $region48: #{cnn_block_forward.2} parent=39 // pred_fallthru
        _
    $region40: #{cnn_block_forward.2} parent=5 // pred_fallthru
      _
  $region6: #{cnn_block_forward.2} parent=0 // loop_footer
    %s14 = sadd.s32 1, %s10
  $region7: #{cnn_block_forward.2} parent=0 // loop_footer_branch
    %9 = sbr.rel target = $region3
  $region8: #{cnn_block_forward.2} parent=0 // loop_exit
    _

</llo_original>
